<compile_context>
chip_gen: v6e
topology: v6e:2x2x1
jax: 0.10.0
libtpu: 0.0.40
codegen_flags: <defaults>
</compile_context>

<pallas_src>
import functools

import jax
import jax.numpy as jnp
from jax.experimental import pallas as pl
from jax.experimental.pallas import tpu as pltpu

_NEG_LARGE = -1e30  # acts as -inf for padded class columns without NaN risk


def classifier_kernel(x_ref, w_ref, b_ref, o_ref):
    # x_ref: (TB, D), w_ref: (D, Cpad), b_ref: (1, Cpad), o_ref: (TB, Cpad)
    logits = jnp.dot(x_ref[...], w_ref[...],
                     preferred_element_type=jnp.float32) + b_ref[...]
    # Numerically-stable log_softmax along the last dim. Padded classes carry a
    # ~-inf bias, so they contribute nothing to the max / logsumexp.
    m = jnp.max(logits, axis=-1, keepdims=True)
    lse = jnp.log(jnp.sum(jnp.exp(logits - m), axis=-1, keepdims=True))
    o_ref[...] = (logits - (m + lse)).astype(o_ref.dtype)


def _round_up(v, m):
    return (v + m - 1) // m * m


def _round_down(v, m):
    return (v // m) * m


def _vmem_limit_bytes():
    """Generation-aware VMEM limit with headroom (fallback: 64 MiB)."""
    try:
        cap = int(getattr(pltpu.get_tpu_info(), "vmem_capacity_bytes", 0))
    except Exception:  # pragma: no cover - off-TPU / old jax
        cap = 0
    if cap <= 0:
        return 64 << 20
    if cap >= (128 << 20):          # v5e / v6e: 128 MiB physical
        return 96 << 20
    return max(cap - (16 << 20), 32 << 20)   # v7x: 64 MiB physical -> ~48 MiB


def _resident_spec(shape):
    """BlockSpec for a grid-invariant (resident) operand, single-buffered."""
    kwargs = {}
    if hasattr(pl, "Buffered"):
        kwargs["pipeline_mode"] = pl.Buffered(buffer_count=1)
    try:
        return pl.BlockSpec(shape, lambda i: (0, 0), **kwargs)
    except TypeError:
        return pl.BlockSpec(shape, lambda i: (0, 0))


@functools.partial(jax.jit,
                   static_argnames=("block_b", "matmul_dtype", "out_dtype"))
def classifier_forward(x, w, b, *, block_b=256, matmul_dtype=None,
                       out_dtype=jnp.float32):
    """x: (B, D), w: (C, D) [PyTorch nn.Linear layout], b: (C,) -> (B, C) log-probs.

    matmul_dtype: optional dtype (e.g. jnp.bfloat16) for the MXU operands;
                  accumulation stays f32. None keeps the input dtype.
    out_dtype:    dtype of the returned log-probs (f32 by default).
    """
    B, D = x.shape
    C, D2 = w.shape
    assert D == D2

    if matmul_dtype is not None:
        x = x.astype(matmul_dtype)
        w = w.astype(matmul_dtype)

    # Lane-dense class dim: pad C to a multiple of 128 and pre-transpose the
    # weight once to (D, Cpad). Padded columns get zero weights and a very
    # negative bias so the softmax is unaffected.
    Cpad = max(_round_up(C, 128), 128)
    w_p = jnp.zeros((D, Cpad), w.dtype).at[:, :C].set(w.T)
    b_p = jnp.full((1, Cpad), _NEG_LARGE, jnp.float32).at[0, :C].set(
        b.astype(jnp.float32))

    # Batch tile: sublane multiple depends on packing (f32: 8, bf16: 16, i8: 32).
    itemsize = jnp.dtype(x.dtype).itemsize
    sub = 8 if itemsize >= 4 else (16 if itemsize == 2 else 32)
    TB = min(max(_round_down(int(block_b), sub), sub), _round_up(B, sub))
    TB = max(_round_down(TB, sub), sub)

    # VMEM budget: resident W/b (single-buffered) + 2x double-buffered x tile +
    # 2x double-buffered out tile + ~3 f32 epilogue temporaries per tile.
    vmem_limit = _vmem_limit_bytes()
    resident = w_p.size * jnp.dtype(w_p.dtype).itemsize + b_p.size * 4
    per_row = (2 * D * itemsize
               + 2 * Cpad * jnp.dtype(out_dtype).itemsize
               + 3 * Cpad * 4)
    avail = vmem_limit - resident - (4 << 20)
    if avail > 0:
        tb_budget = max(_round_down(avail // per_row, sub), sub)
        TB = min(TB, int(tb_budget))

    # Guarantee >= 2 grid steps when the batch allows it (megacore + pipelining).
    if _round_up(B, TB) <= TB and B > sub:
        TB = max(_round_down((TB + 1) // 2, sub), sub)

    Bpad = _round_up(B, TB)
    x_p = x if Bpad == B else jnp.zeros((Bpad, D), x.dtype).at[:B, :].set(x)

    grid = (Bpad // TB,)
    bytes_accessed = (x_p.size * itemsize + resident
                      + Bpad * Cpad * jnp.dtype(out_dtype).itemsize)

    out = pl.pallas_call(
        classifier_kernel,
        out_shape=jax.ShapeDtypeStruct((Bpad, Cpad), out_dtype),
        grid=grid,
        in_specs=[
            pl.BlockSpec((TB, D), lambda i: (i, 0)),   # x: streamed over batch
            _resident_spec((D, Cpad)),                 # W: resident, 1 buffer
            _resident_spec((1, Cpad)),                 # b: resident, 1 buffer
        ],
        out_specs=pl.BlockSpec((TB, Cpad), lambda i: (i, 0)),
        compiler_params=pltpu.CompilerParams(
            dimension_semantics=("parallel",),
            vmem_limit_bytes=int(vmem_limit),
        ),
        cost_estimate=pl.CostEstimate(
            flops=2 * Bpad * D * Cpad,
            transcendentals=Bpad * Cpad,
            bytes_accessed=int(bytes_accessed),
        ),
    )(x_p, w_p, b_p)

    return out[:B, :C]


if __name__ == "__main__":
    key = jax.random.PRNGKey(0)
    batch, input_dim, num_classes = 8, 32, 16

    kx, kw, kb = jax.random.split(key, 3)
    x = jax.random.normal(kx, (batch, input_dim), dtype=jnp.float32)
    # Deterministic parameter init (mimics nn.Linear's uniform(-1/sqrt(D), 1/sqrt(D)))
    bound = 1.0 / (input_dim ** 0.5)
    w = jax.random.uniform(kw, (num_classes, input_dim), jnp.float32, -bound, bound)
    b = jax.random.uniform(kb, (num_classes,), jnp.float32, -bound, bound)

    out = classifier_forward(x, w, b)
    out = jax.block_until_ready(out)

    # Reference check against plain JAX
    ref = jax.nn.log_softmax(x @ w.T + b, axis=-1)
    assert out.shape == (batch, num_classes)
    assert jnp.allclose(out, ref, atol=1e-5, rtol=1e-5), float(jnp.max(jnp.abs(out - ref)))

    print("KERNEL_OK")
</pallas_src>

<mosaic_0001>
module attributes {stable_mosaic.version = 11 : i64} {
  func.func @classifier_kernel(%arg0: i32, %arg1: memref<8x32xf32, #tpu.memory_space<vmem>>, %arg2: memref<32x128xf32, #tpu.memory_space<vmem>>, %arg3: memref<1x128xf32, #tpu.memory_space<vmem>>, %arg4: memref<8x128xf32, #tpu.memory_space<vmem>>) attributes {dimension_semantics = [#tpu.dimension_semantics<parallel>], iteration_bounds = array<i64: 1>, scalar_prefetch = 0 : i64, scratch_operands = 0 : i64, tpu.core_type = #tpu.core_type<tc>, window_params = [{transform_indices = @transform_0, window_bounds = array<i64: 8, 32>}, {pipeline_mode = #tpu.pipeline_mode<synchronous>, transform_indices = @transform_1, window_bounds = array<i64: 32, 128>}, {pipeline_mode = #tpu.pipeline_mode<synchronous>, transform_indices = @transform_2, window_bounds = array<i64: 1, 128>}, {transform_indices = @transform_3, window_bounds = array<i64: 8, 128>}]} {
    %c0 = arith.constant 0 : index
    %c0_0 = arith.constant 0 : index
    %0 = vector.load %arg1[%c0, %c0_0] : memref<8x32xf32, #tpu.memory_space<vmem>>, vector<8x32xf32>
    %c0_1 = arith.constant 0 : index
    %c0_2 = arith.constant 0 : index
    %1 = vector.load %arg2[%c0_1, %c0_2] : memref<32x128xf32, #tpu.memory_space<vmem>>, vector<32x128xf32>
    %cst = arith.constant dense<0.000000e+00> : vector<8x128xf32>
    %2 = tpu.matmul %0, %1, %cst {dimension_numbers = #tpu.dot_dimension_numbers<[1], [0], [0], [1], [0, 0, 1, 1], [], []>} : vector<8x32xf32>, vector<32x128xf32>, vector<8x128xf32> -> vector<8x128xf32>
    %c0_3 = arith.constant 0 : index
    %c0_4 = arith.constant 0 : index
    %3 = vector.load %arg3[%c0_3, %c0_4] : memref<1x128xf32, #tpu.memory_space<vmem>>, vector<1x128xf32>
    %4 = vector.broadcast %3 : vector<1x128xf32> to vector<8x128xf32>
    %5 = arith.addf %2, %4 : vector<8x128xf32>
    %cst_5 = arith.constant dense<0xFF800000> : vector<8xf32>
    %6 = vector.multi_reduction <maximumf>, %5, %cst_5 [1] : vector<8x128xf32> to vector<8xf32>
    %7 = vector.shape_cast %6 : vector<8xf32> to vector<8x1xf32>
    %8 = vector.broadcast %7 : vector<8x1xf32> to vector<8x128xf32>
    %9 = arith.subf %5, %8 : vector<8x128xf32>
    %10 = math.exp %9 : vector<8x128xf32>
    %cst_6 = arith.constant dense<0.000000e+00> : vector<8xf32>
    %11 = vector.multi_reduction <add>, %10, %cst_6 [1] : vector<8x128xf32> to vector<8xf32>
    %12 = vector.shape_cast %11 : vector<8xf32> to vector<8x1xf32>
    %13 = math.log %12 : vector<8x1xf32>
    %14 = arith.addf %7, %13 : vector<8x1xf32>
    %15 = vector.broadcast %14 : vector<8x1xf32> to vector<8x128xf32>
    %16 = arith.subf %5, %15 : vector<8x128xf32>
    %c0_7 = arith.constant 0 : index
    %c0_8 = arith.constant 0 : index
    %17 = vector.load %arg4[%c0_7, %c0_8] : memref<8x128xf32, #tpu.memory_space<vmem>>, vector<8x128xf32>
    tpu.vector_store %arg4[%c0_7, %c0_8], %16 {strides = array<i32>} : memref<8x128xf32, #tpu.memory_space<vmem>>, vector<8x128xf32>,
    return
  }
  func.func @transform_0(%arg0: i32) -> (i32, i32) {
    %c0_i32 = arith.constant 0 : i32
    %c0_i32_0 = arith.constant 0 : i32
    return %arg0, %c0_i32 : i32, i32
  }
  func.func @transform_1(%arg0: i32) -> (i32, i32) {
    %c0_i32 = arith.constant 0 : i32
    %c0_i32_0 = arith.constant 0 : i32
    %c0_i32_1 = arith.constant 0 : i32
    return %c0_i32, %c0_i32_0 : i32, i32
  }
  func.func @transform_2(%arg0: i32) -> (i32, i32) {
    %c0_i32 = arith.constant 0 : i32
    %c0_i32_0 = arith.constant 0 : i32
    %c0_i32_1 = arith.constant 0 : i32
    return %c0_i32, %c0_i32_0 : i32, i32
  }
  func.func @transform_3(%arg0: i32) -> (i32, i32) {
    %c0_i32 = arith.constant 0 : i32
    %c0_i32_0 = arith.constant 0 : i32
    return %arg0, %c0_i32 : i32, i32
  }
}

</mosaic_0001>

<llo_original>
// kernel: classifier_forward.1
$region0: #{classifier_forward.1}
  #allocation0 [shape = 'u32[]', space=smem, size = 0x4, offset = 0x4, fixed_abs, tag = 'smem constant byte address 0x4 - core index']
  #allocation1 [shape = 'u32[144,128]{1,0:T(1,128)}', space=vmem, size = 0x12000, scoped, tag = 'internal scratch']
  %s0 = inlined_call_operand.vmem [shape: f32[8,32], index: 0, kind: input, shape index: {}]
  %s1 = inlined_call_operand.vmem [shape: f32[32,128], index: 1, kind: input, shape index: {}]
  %s2 = inlined_call_operand.vmem [shape: f32[1,128], index: 2, kind: input, shape index: {}]
  %s3 = inlined_call_operand.hbm [shape: f32[8,128], index: 3, kind: output, shape index: {}]
  %s4 = sld [smem:[#allocation0]]
  $region22: #{classifier_forward.1} parent=0
    _
  %s6 = ssub.s32 1, %s4
  %s7 = scalar_select 0, %s6, %s4
  $region1: #{classifier_forward.1} parent=0
    #allocation2 [shape = 'u8[4096]{0}', space=vmem, size = 0x1000, scoped, tag = 'output window, operand 0, single buffered']
    #allocation3 [shape = 's32[1]{0}', space=sflag, size = 0x4, scoped, tag = 'scoped memory for classifier_forward.1']
    %8 = vsyncpa [#allocation3], 0
    // Predicated region
    $region2: #{classifier_forward.1} parent=1 // pred_check
      _
    $region3: #{classifier_forward.1} parent=1 // pred_check_branch
      %10 = sbr.rel (0) target = $region5
    $region4: #{classifier_forward.1} parent=1 // pred_region
      _
    $region5: #{classifier_forward.1} parent=1 // pred_fallthru
      _
    // Predicated region
    $region6: #{classifier_forward.1} parent=1 // pred_check
      _
    $region7: #{classifier_forward.1} parent=1 // pred_check_branch
      %12 = sbr.rel (0) target = $region9
    $region8: #{classifier_forward.1} parent=1 // pred_region
      _
    $region9: #{classifier_forward.1} parent=1 // pred_fallthru
      _
    // Predicated region
    $region10: #{classifier_forward.1} parent=1 // pred_check
      _
    $region11: #{classifier_forward.1} parent=1 // pred_check_branch
      %14 = sbr.rel (0) target = $region13
    $region12: #{classifier_forward.1} parent=1 // pred_region
      _
    $region13: #{classifier_forward.1} parent=1 // pred_fallthru
      _
    %v15 = vld [vmem:[%s0] sm:$0xff]
    %v16 = vld [vmem:[%s1] sm:$0xff]
    %v17 = vld [vmem:[%s1 + $0x8] sm:$0xff]
    %v18 = vld [vmem:[%s1 + $0x10] sm:$0xff]
    %v19 = vld [vmem:[%s1 + $0x18] sm:$0xff]
    %v20 = vld [vmem:[%s2] sm:$0x1]
    %v22 = vlaneseq
    %v23 = vshrl.u32 %v22, 7
    %v24 = vsub.s32 0, %v23
    %v25 = vrot.slane %v20, %v24
    %vm27 = vcmask 261120
    %v29 = vsel %vm27, %v15, 0
    %31 = vmatprep.subr.mxu0 0.0
    %32 = vmatpush1.msra.mxu0 0.0
    %33 = vmatprep.subr.mxu0 0.0
    %34 = vmatpush1.msra.mxu0 0.0
    %35 = vmatprep.subr.mxu0 0.0
    %36 = vmatpush1.msra.mxu0 0.0
    %37 = vmatprep.subr.mxu0 0.0
    %38 = vmatpush1.msra.mxu0 0.0
    %39 = vmatprep.subr.mxu0 0.0
    %40 = vmatpush1.msra.mxu0 0.0
    %41 = vmatprep.subr.mxu0 0.0
    %42 = vmatpush1.msra.mxu0 0.0
    %43 = vmatprep.subr.mxu0 0.0
    %44 = vmatpush1.msra.mxu0 0.0
    %45 = vmatprep.subr.mxu0 0.0
    %46 = vmatpush1.msra.mxu0 0.0
    %47 = vmatprep.subr.mxu0 0.0
    %48 = vmatpush1.msra.mxu0 0.0
    %49 = vmatprep.subr.mxu0 0.0
    %50 = vmatpush1.msra.mxu0 0.0
    %51 = vmatprep.subr.mxu0 0.0
    %52 = vmatpush1.msra.mxu0 0.0
    %53 = vmatprep.subr.mxu0 0.0
    %54 = vmatpush1.msra.mxu0 0.0
    %55 = vmatprep.subr.mxu0 0.0
    %56 = vmatpush1.msra.mxu0 %v19
    %57 = vmatprep.subr.mxu0 0.0
    %58 = vmatpush1.msra.mxu0 %v18
    %59 = vmatprep.subr.mxu0 0.0
    %60 = vmatpush1.msra.mxu0 %v17
    %61 = vmatprep.subr.mxu0 0.0
    %62 = vmatpush1.msra.mxu0 %v16
    %63 = vmatprep.subr.mxu0 0.0
    %64 = vmatpush2.msra.mxu0 0.0
    %65 = vmatprep.subr.mxu0 0.0
    %66 = vmatpush2.msra.mxu0 0.0
    %67 = vmatprep.subr.mxu0 0.0
    %68 = vmatpush2.msra.mxu0 0.0
    %69 = vmatprep.subr.mxu0 0.0
    %70 = vmatpush2.msra.mxu0 0.0
    %71 = vmatprep.subr.mxu0 0.0
    %72 = vmatpush2.msra.mxu0 0.0
    %73 = vmatprep.subr.mxu0 0.0
    %74 = vmatpush2.msra.mxu0 0.0
    %75 = vmatprep.subr.mxu0 0.0
    %76 = vmatpush2.msra.mxu0 0.0
    %77 = vmatprep.subr.mxu0 0.0
    %78 = vmatpush2.msra.mxu0 0.0
    %79 = vmatprep.subr.mxu0 0.0
    %80 = vmatpush2.msra.mxu0 0.0
    %81 = vmatprep.subr.mxu0 0.0
    %82 = vmatpush2.msra.mxu0 0.0
    %83 = vmatprep.subr.mxu0 0.0
    %84 = vmatpush2.msra.mxu0 0.0
    %85 = vmatprep.subr.mxu0 0.0
    %86 = vmatpush2.msra.mxu0 0.0
    %87 = vmatprep.subr.mxu0 0.0
    %88 = vmatpush2.msra.mxu0 0.0
    %89 = vmatprep.subr.mxu0 0.0
    %90 = vmatpush2.msra.mxu0 0.0
    %91 = vmatprep.subr.mxu0 0.0
    %92 = vmatpush2.msra.mxu0 0.0
    %93 = vmatprep.subr.mxu0 0.0
    %94 = vmatpush2.msra.mxu0 0.0
    %95 = vmatprep.mubr.f32.mxu0 0.0
    %96 = vmatmul.mubr.f32.gmra.mxu0 %v29
    %v97 = vpop.f32.mrf.mxu0
    %v98 = vadd.f32 %v25, %v97
    %v99 = vpop.f32.mrf.mxu0
    %100 = vdwg.mxu0
    %101 = vmax.xlane.f32.xlu0 %v98
    %v102 = vpop.xlane.xlu0 %101
    %v103 = vsub.f32 %v98, %v102
    %v104 = vmul.f32 %v103, 1.442695
    %v105 = vpow.pop %v104
    %106 = vadd.xlane.f32.xlu0 %v105
    %v107 = vpop.xlane.xlu0 %106
    %v108 = vlog2.pop %v107
    %v109 = vmul.f32 %v108, 0.6931472
    %v110 = vadd.f32 %v102, %v109
    %v111 = vsub.f32 %v98, %v110
    %112 = vst [vmem:[#allocation2] sm:$0xff] %v111
    // Predicated region
    $region14: #{classifier_forward.1} parent=1 // pred_check
      _
    $region15: #{classifier_forward.1} parent=1 // pred_check_branch
      %114 = sbr.rel (0) target = $region17
    $region16: #{classifier_forward.1} parent=1 // pred_region
      %s116 = ssub.s32 128, 128
      %117 = vsyncadd [#allocation3], %s116
      %s119 = sshll.u32 [#allocation2], 4
      %s120 = int_to_ptr.vmem [resolvable:$true] %s119
      %122 = dma.vmem_to_hbm [thread:$0]  %s120, 128, %s3, [#allocation3]
    $region17: #{classifier_forward.1} parent=1 // pred_fallthru
      _
    // Predicated region
    $region18: #{classifier_forward.1} parent=1 // pred_check
      _
    $region19: #{classifier_forward.1} parent=1 // pred_check_branch
      %124 = sbr.rel (0) target = $region21
    $region20: #{classifier_forward.1} parent=1 // pred_region
      %125 = dma.done [#allocation3], 128
    $region21: #{classifier_forward.1} parent=1 // pred_fallthru
      _
    %126 = vsyncpa [#allocation3], 1

</llo_original>
